<compile_context>
chip_gen: v6e
topology: v6e:2x2x1
jax: 0.10.0
libtpu: 0.0.40
codegen_flags: <defaults>
</compile_context>

<pallas_src>
import jax
import jax.numpy as jnp
from jax.experimental import pallas as pl
from jax.experimental.pallas import tpu as pltpu

EPS = 1e-5
_LANE = 128


def _round_up(x, m):
    return ((x + m - 1) // m) * m


def _vmem_capacity_bytes():
    """Device VMEM capacity; conservative v7x-sized fallback if query fails."""
    try:
        return int(pltpu.get_tpu_info().vmem_capacity_bytes)
    except Exception:
        return 64 * 2**20


def _make_layernorm_kernel(n_rows, block_rows, ragged):
    """Row-wise LayerNorm on one (block_rows, d) VMEM tile.

    `ragged=True` => the last grid block extends past n_rows; its garbage tail
    rows are zero-masked so intermediates stay finite (they are dropped by the
    bounded store regardless).  ~2 flops/byte: all VPU/XLU/EUP work hides under
    the HBM stream, so the math stays simple (two-pass mean/var, f32, rsqrt).
    """

    def kernel(x_ref, gamma_ref, beta_ref, o_ref):
        x = x_ref[...].astype(jnp.float32)                       # (rows, d)
        if ragged:
            row0 = pl.program_id(0) * block_rows
            gid = row0 + jax.lax.broadcasted_iota(jnp.int32, x.shape, 0)
            x = jnp.where(gid < n_rows, x, 0.0)
        mean = jnp.mean(x, axis=-1, keepdims=True)               # (rows, 1)
        xc = x - mean
        var = jnp.mean(xc * xc, axis=-1, keepdims=True)          # (rows, 1)
        inv = jax.lax.rsqrt(var + EPS)
        y = xc * inv * gamma_ref[...] + beta_ref[...]            # broadcast (1, d)
        o_ref[...] = y.astype(o_ref.dtype)

    return kernel


def _pick_block_rows(n, d, itemsize, vmem_cap):
    """VMEM-budgeted, sublane-aligned row tile with >= 2 grid steps when possible."""
    align = 16 if itemsize == 2 else 8      # bf16 packs 2 rows per sublane
    # Per-step working set per row: double-buffered input + output tiles plus
    # ~3 f32 temporaries (x, xc, y) materialized by the kernel body.
    bytes_per_row = d * (4 * itemsize + 3 * 4)
    budget = min(24 * 2**20, vmem_cap // 3)
    max_rows = max(align, (budget // bytes_per_row) // align * align)
    max_rows = min(max_rows, 8192)
    # v7x has 2 TensorCores: make sure the "parallel" grid axis has >= 2 steps
    # whenever there is enough work so both cores get a share (no-op for big n).
    if n > 2 * align:
        max_rows = min(max_rows, _round_up(pl.cdiv(n, 2), align))
    grid = max(1, pl.cdiv(n, max_rows))
    block_rows = min(max_rows, _round_up(pl.cdiv(n, grid), align))
    if block_rows >= n:
        block_rows = n          # single full-extent block is always legal
    return block_rows


def identity_norm_layer(h, gamma, beta, *, block_rows=None):
    """LayerNorm over the last dim of h (num_nodes, dim_out) via Pallas on TPU."""
    n, d = h.shape
    itemsize = jnp.dtype(h.dtype).itemsize
    align = 16 if itemsize == 2 else 8
    vmem_cap = _vmem_capacity_bytes()

    if block_rows is None:
        block_rows = _pick_block_rows(n, d, itemsize, vmem_cap)
    else:
        block_rows = int(min(block_rows, n))
        assert block_rows == n or block_rows % align == 0, (
            f"block_rows must be a multiple of {align} or equal the row count")

    grid = pl.cdiv(n, block_rows)
    ragged = (n % block_rows) != 0

    gamma2 = gamma.reshape(1, d).astype(jnp.float32)
    beta2 = beta.reshape(1, d).astype(jnp.float32)

    # Scoped VMEM: double-buffered in/out tiles + in-kernel f32 temporaries +
    # params + headroom, capped below the device's physical VMEM (64 MiB v7x).
    tile_bytes = block_rows * d * itemsize
    needed = 4 * tile_bytes + 3 * block_rows * d * 4 + 2 * d * 4 + (2 << 20)
    vmem_limit = int(max(16 << 20, min(needed, vmem_cap - (8 << 20))))

    kernel = _make_layernorm_kernel(n, block_rows, ragged)

    # d is never split, so the lane (last) block dim always equals the full
    # feature dim: d % 128 == 0 gives unmasked lane-dense stores, other widths
    # still run fused in-kernel (masked stores), with no host pad/slice pass.
    # TODO(synk): for small d (< 128) pack multiple logical rows per 128-lane
    # register row with segmented reductions to recover lane density.
    return pl.pallas_call(
        kernel,
        out_shape=jax.ShapeDtypeStruct((n, d), h.dtype),
        grid_spec=pltpu.PrefetchScalarGridSpec(
            num_scalar_prefetch=0,
            grid=(grid,),
            in_specs=[
                pl.BlockSpec((block_rows, d), lambda i: (i, 0)),
                pl.BlockSpec((1, d), lambda i: (0, 0)),
                pl.BlockSpec((1, d), lambda i: (0, 0)),
            ],
            out_specs=pl.BlockSpec((block_rows, d), lambda i: (i, 0)),
        ),
        compiler_params=pltpu.CompilerParams(
            dimension_semantics=("parallel",),
            vmem_limit_bytes=vmem_limit,
        ),
    )(h, gamma2, beta2)


if __name__ == "__main__":
    # Node-feature matrix (num_nodes, dim_out): dim_out lane-dense (128);
    # num_nodes deliberately NOT a multiple of the chosen block_rows so the
    # unpadded ragged-tail path (bounded DMA + in-kernel row mask) is exercised.
    num_nodes, dim_out = 200, 128

    key = jax.random.PRNGKey(0)
    h = jax.random.normal(key, (num_nodes, dim_out), dtype=jnp.float32)

    # torch.nn.LayerNorm default init: weight = ones, bias = zeros.
    gamma = jnp.ones((dim_out,), dtype=jnp.float32)
    beta = jnp.zeros((dim_out,), dtype=jnp.float32)

    out = jax.block_until_ready(identity_norm_layer(h, gamma, beta))

    # Pure-JAX reference to confirm semantics.
    mean = jnp.mean(h, axis=-1, keepdims=True)
    var = jnp.mean((h - mean) ** 2, axis=-1, keepdims=True)
    ref = (h - mean) / jnp.sqrt(var + EPS) * gamma + beta
    assert out.shape == ref.shape
    assert jnp.allclose(out, ref, atol=1e-5, rtol=1e-5), "mismatch vs reference"

    print("KERNEL_OK")
</pallas_src>

<mosaic_0001>
module attributes {stable_mosaic.version = 11 : i64} {
  func.func @kernel(%arg0: i32, %arg1: memref<104x128xf32, #tpu.memory_space<vmem>>, %arg2: memref<1x128xf32, #tpu.memory_space<vmem>>, %arg3: memref<1x128xf32, #tpu.memory_space<vmem>>, %arg4: memref<104x128xf32, #tpu.memory_space<vmem>>) attributes {dimension_semantics = [#tpu.dimension_semantics<parallel>], iteration_bounds = array<i64: 2>, scalar_prefetch = 0 : i64, scratch_operands = 0 : i64, tpu.core_type = #tpu.core_type<tc>, window_params = [{transform_indices = @transform_0, window_bounds = array<i64: 104, 128>}, {pipeline_mode = #tpu.pipeline_mode<synchronous>, transform_indices = @transform_1, window_bounds = array<i64: 1, 128>}, {pipeline_mode = #tpu.pipeline_mode<synchronous>, transform_indices = @transform_2, window_bounds = array<i64: 1, 128>}, {transform_indices = @transform_3, window_bounds = array<i64: 104, 128>}]} {
    %c0 = arith.constant 0 : index
    %c0_0 = arith.constant 0 : index
    %0 = vector.load %arg1[%c0, %c0_0] : memref<104x128xf32, #tpu.memory_space<vmem>>, vector<104x128xf32>
    %c104_i32 = arith.constant 104 : i32
    %1 = arith.muli %arg0, %c104_i32 : i32
    %2 = tpu.iota {dimensions = array<i32: 0>} : vector<104x128xi32>
    %3 = vector.broadcast %1 : i32 to vector<104x128xi32>
    %4 = arith.addi %3, %2 : vector<104x128xi32>
    %c200_i32 = arith.constant 200 : i32
    %5 = vector.broadcast %c200_i32 : i32 to vector<104x128xi32>
    %6 = arith.cmpi slt, %4, %5 : vector<104x128xi32>
    %cst = arith.constant 0.000000e+00 : f32
    %7 = vector.broadcast %cst : f32 to vector<104x128xf32>
    %8 = arith.select %6, %0, %7 : vector<104x128xi1>, vector<104x128xf32>
    %cst_1 = arith.constant dense<0.000000e+00> : vector<104xf32>
    %9 = vector.multi_reduction <add>, %8, %cst_1 [1] : vector<104x128xf32> to vector<104xf32>
    %10 = vector.shape_cast %9 : vector<104xf32> to vector<104x1xf32>
    %cst_2 = arith.constant 1.280000e+02 : f32
    %11 = vector.broadcast %cst_2 : f32 to vector<104x1xf32>
    %12 = arith.divf %10, %11 : vector<104x1xf32>
    %13 = vector.broadcast %12 : vector<104x1xf32> to vector<104x128xf32>
    %14 = arith.subf %8, %13 : vector<104x128xf32>
    %15 = arith.mulf %14, %14 : vector<104x128xf32>
    %cst_3 = arith.constant dense<0.000000e+00> : vector<104xf32>
    %16 = vector.multi_reduction <add>, %15, %cst_3 [1] : vector<104x128xf32> to vector<104xf32>
    %17 = vector.shape_cast %16 : vector<104xf32> to vector<104x1xf32>
    %cst_4 = arith.constant 1.280000e+02 : f32
    %18 = vector.broadcast %cst_4 : f32 to vector<104x1xf32>
    %19 = arith.divf %17, %18 : vector<104x1xf32>
    %cst_5 = arith.constant 9.99999974E-6 : f32
    %20 = vector.broadcast %cst_5 : f32 to vector<104x1xf32>
    %21 = arith.addf %19, %20 : vector<104x1xf32>
    %22 = math.rsqrt %21 : vector<104x1xf32>
    %23 = vector.broadcast %22 : vector<104x1xf32> to vector<104x128xf32>
    %24 = arith.mulf %14, %23 : vector<104x128xf32>
    %c0_6 = arith.constant 0 : index
    %c0_7 = arith.constant 0 : index
    %25 = vector.load %arg2[%c0_6, %c0_7] : memref<1x128xf32, #tpu.memory_space<vmem>>, vector<1x128xf32>
    %26 = vector.broadcast %25 : vector<1x128xf32> to vector<104x128xf32>
    %27 = arith.mulf %24, %26 : vector<104x128xf32>
    %c0_8 = arith.constant 0 : index
    %c0_9 = arith.constant 0 : index
    %28 = vector.load %arg3[%c0_8, %c0_9] : memref<1x128xf32, #tpu.memory_space<vmem>>, vector<1x128xf32>
    %29 = vector.broadcast %28 : vector<1x128xf32> to vector<104x128xf32>
    %30 = arith.addf %27, %29 : vector<104x128xf32>
    %c0_10 = arith.constant 0 : index
    %c0_11 = arith.constant 0 : index
    %31 = vector.load %arg4[%c0_10, %c0_11] : memref<104x128xf32, #tpu.memory_space<vmem>>, vector<104x128xf32>
    tpu.vector_store %arg4[%c0_10, %c0_11], %30 {strides = array<i32>} : memref<104x128xf32, #tpu.memory_space<vmem>>, vector<104x128xf32>,
    return
  }
  func.func @transform_0(%arg0: i32) -> (i32, i32) {
    %c0_i32 = arith.constant 0 : i32
    %c0_i32_0 = arith.constant 0 : i32
    return %arg0, %c0_i32 : i32, i32
  }
  func.func @transform_1(%arg0: i32) -> (i32, i32) {
    %c0_i32 = arith.constant 0 : i32
    %c0_i32_0 = arith.constant 0 : i32
    %c0_i32_1 = arith.constant 0 : i32
    return %c0_i32, %c0_i32_0 : i32, i32
  }
  func.func @transform_2(%arg0: i32) -> (i32, i32) {
    %c0_i32 = arith.constant 0 : i32
    %c0_i32_0 = arith.constant 0 : i32
    %c0_i32_1 = arith.constant 0 : i32
    return %c0_i32, %c0_i32_0 : i32, i32
  }
  func.func @transform_3(%arg0: i32) -> (i32, i32) {
    %c0_i32 = arith.constant 0 : i32
    %c0_i32_0 = arith.constant 0 : i32
    return %arg0, %c0_i32 : i32, i32
  }
}

</mosaic_0001>

<llo_original>
// kernel: tpu_custom_call.1
$region0: #{tpu_custom_call.1}
  #allocation0 [shape = 'u32[]', space=smem, size = 0x4, offset = 0x4, fixed_abs, tag = 'smem constant byte address 0x4 - core index']
  #allocation1 [shape = 'u32[144,128]{1,0:T(1,128)}', space=vmem, size = 0x12000, scoped, tag = 'internal scratch']
  %s0 = inlined_call_operand.hbm [shape: f32[200,128], index: 0, kind: input, shape index: {}]
  %s1 = inlined_call_operand.vmem [shape: f32[1,128], index: 1, kind: input, shape index: {}]
  %s2 = inlined_call_operand.vmem [shape: f32[1,128], index: 2, kind: input, shape index: {}]
  %s3 = inlined_call_operand.hbm [shape: f32[200,128], index: 3, kind: output, shape index: {}]
  %s4 = sld [smem:[#allocation0]]
  $region49: #{tpu_custom_call.1} parent=0
    _
  %s6 = ssub.s32 1, %s4
  %s7 = scalar_select 0, %s6, %s4
  $region1: #{tpu_custom_call.1} parent=0
    #allocation2 [shape = 'u8[106496]{0}', space=vmem, size = 0x1a000, scoped, tag = 'input window, operand 0']
    #allocation3 [shape = 's32[2]{0}', space=sflag, size = 0x8, scoped, tag = 'scoped memory for tpu_custom_call.1']
    #allocation4 [shape = 's32[2]{0}', space=sflag, size = 0x8, scoped, tag = 'scoped memory for tpu_custom_call.1']
    #allocation5 [shape = 'u8[106496]{0}', space=vmem, size = 0x1a000, scoped, tag = 'output window, operand 0']
    %8 = vsyncpa [#allocation3], 0
    %s9 = scalar_lea.sflag [#allocation3], 1
    %10 = vsyncpa %s9, 0
    %11 = vsyncpa [#allocation4], 0
    %s12 = scalar_lea.sflag [#allocation4], 1
    %13 = vsyncpa %s12, 0
    loop: start=0, step=1, limit=4
    $region2: #{tpu_custom_call.1} parent=1 // loop_pre_header
      _
    $region3: #{tpu_custom_call.1} parent=1 // loop_header
      %s15 = sphi 0, %s19
      %p16 = scmp.ge.s32.totalorder %s15, 4
      %s25 = sphi 0, %s27
      %s28 = sphi 0, %s25
      %s29 = sphi 0, %s28
      %s45 = sphi 0, %s29
      %s49 = sphi 0, %s49
      %s51 = sphi 0, %s49
      %s52 = sphi 0, %s51
      %s66 = sphi 0, %s52
      %s70 = sphi 0, %s70
      %s72 = sphi 0, %s70
      %s73 = sphi 0, %s72
      %s87 = sphi 0, %s73
      %s93 = sphi 0, %s95
      %s96 = sphi 0, %s93
      %s97 = sphi 0, %s96
      %s113 = sphi 0, %s97
    $region4: #{tpu_custom_call.1} parent=1 // loop_header_branch
      %18 = sbr.rel (%p16) target = $region8
    $region5: #{tpu_custom_call.1} parent=1 // loop_body
      %s20 = ssub.s32 %s15, 1
      %s21 = ssub.s32 %s15, 2
      %s22 = sadd.s32 %s15, 1
      %s23 = ssub.s32 %s15, %s22
      %p24 = scmp.eq.s32.totalorder %s23, 0
      %s26 = sadd.s32 %s25, 1
      %s27 = scalar_select %p24, %s25, %s26
      %p30 = pneg %p24
      %p31 = scmp.eq.s32.totalorder %s15, 1
      %p32 = por %p30, %p31
      %p33 = scmp.ne.s32.totalorder %s25, %s28
      %p34 = scmp.eq.s32.totalorder %s15, 0
      %p35 = por %p33, %p34
      %p36 = scmp.ne.s32.totalorder %s25, %s28
      %p37 = scmp.eq.s32.totalorder %s20, 1
      %p38 = por %p36, %p37
      %p39 = scmp.ne.s32.totalorder %s28, %s29
      %p40 = scmp.eq.s32.totalorder %s20, 0
      %p41 = por %p39, %p40
      %p42 = scmp.ne.s32.totalorder %s28, %s29
      %p43 = scmp.eq.s32.totalorder %s21, 1
      %p44 = por %p42, %p43
      %p46 = scmp.ne.s32.totalorder %s29, %s45
      %p47 = scmp.eq.s32.totalorder %s21, 0
      %p48 = por %p46, %p47
      %s50 = sadd.s32 %s49, 1
      %p53 = scmp.eq.s32.totalorder %s15, 1
      %p54 = scmp.ne.s32.totalorder %s49, %s51
      %p55 = scmp.eq.s32.totalorder %s15, 0
      %p56 = por %p54, %p55
      %p57 = scmp.ne.s32.totalorder %s49, %s51
      %p58 = scmp.eq.s32.totalorder %s20, 1
      %p59 = por %p57, %p58
      %p60 = scmp.ne.s32.totalorder %s51, %s52
      %p61 = scmp.eq.s32.totalorder %s20, 0
      %p62 = por %p60, %p61
      %p63 = scmp.ne.s32.totalorder %s51, %s52
      %p64 = scmp.eq.s32.totalorder %s21, 1
      %p65 = por %p63, %p64
      %p67 = scmp.ne.s32.totalorder %s52, %s66
      %p68 = scmp.eq.s32.totalorder %s21, 0
      %p69 = por %p67, %p68
      %s71 = sadd.s32 %s70, 1
      %p74 = scmp.eq.s32.totalorder %s15, 1
      %p75 = scmp.ne.s32.totalorder %s70, %s72
      %p76 = scmp.eq.s32.totalorder %s15, 0
      %p77 = por %p75, %p76
      %p78 = scmp.ne.s32.totalorder %s70, %s72
      %p79 = scmp.eq.s32.totalorder %s20, 1
      %p80 = por %p78, %p79
      %p81 = scmp.ne.s32.totalorder %s72, %s73
      %p82 = scmp.eq.s32.totalorder %s20, 0
      %p83 = por %p81, %p82
      %p84 = scmp.ne.s32.totalorder %s72, %s73
      %p85 = scmp.eq.s32.totalorder %s21, 1
      %p86 = por %p84, %p85
      %p88 = scmp.ne.s32.totalorder %s73, %s87
      %p89 = scmp.eq.s32.totalorder %s21, 0
      %p90 = por %p88, %p89
      %s91 = ssub.s32 %s15, %s22
      %p92 = scmp.eq.s32.totalorder %s91, 0
      %s94 = sadd.s32 %s93, 1
      %s95 = scalar_select %p92, %s93, %s94
      %p98 = pneg %p92
      %p99 = scmp.eq.s32.totalorder %s15, 1
      %p100 = por %p98, %p99
      %p101 = scmp.ne.s32.totalorder %s93, %s96
      %p102 = scmp.eq.s32.totalorder %s15, 0
      %p103 = por %p101, %p102
      %p104 = scmp.ne.s32.totalorder %s93, %s96
      %p105 = scmp.eq.s32.totalorder %s20, 1
      %p106 = por %p104, %p105
      %p107 = scmp.ne.s32.totalorder %s96, %s97
      %p108 = scmp.eq.s32.totalorder %s20, 0
      %p109 = por %p107, %p108
      %p110 = scmp.ne.s32.totalorder %s96, %s97
      %p111 = scmp.eq.s32.totalorder %s21, 1
      %p112 = por %p110, %p111
      %p114 = scmp.ne.s32.totalorder %s97, %s113
      %p115 = scmp.eq.s32.totalorder %s21, 0
      %p116 = por %p114, %p115
      %p117 = scmp.le.s32.totalorder 1, %s15
      %p118 = scmp.lt.s32.totalorder %s15, 3
      %p119 = pnand %p117, %p118
      %p120 = pneg %p119
      // Predicated region
      $region9: #{tpu_custom_call.1} parent=5 // pred_check
        _
      $region10: #{tpu_custom_call.1} parent=5 // pred_check_branch
        %122 = sbr.rel (%p119) target = $region12
      $region11: #{tpu_custom_call.1} parent=5 // pred_region
        %s123 = ssub.s32 %s15, 1
        // Predicated region
        $region13: #{tpu_custom_call.1} parent=11 // pred_check
          %p124 = pneg %p62
        $region14: #{tpu_custom_call.1} parent=11 // pred_check_branch
          %126 = sbr.rel (%p124) target = $region16
        $region15: #{tpu_custom_call.1} parent=11 // pred_region
          _
        $region16: #{tpu_custom_call.1} parent=11 // pred_fallthru
          _
        // Predicated region
        $region17: #{tpu_custom_call.1} parent=11 // pred_check
          %p127 = pneg %p83
        $region18: #{tpu_custom_call.1} parent=11 // pred_check_branch
          %129 = sbr.rel (%p127) target = $region20
        $region19: #{tpu_custom_call.1} parent=11 // pred_region
          _
        $region20: #{tpu_custom_call.1} parent=11 // pred_fallthru
          _
      $region12: #{tpu_custom_call.1} parent=5 // pred_fallthru
        _
      %p130 = scmp.lt.s32.totalorder %s15, 2
      // Predicated region
      $region21: #{tpu_custom_call.1} parent=5 // pred_check
        %p131 = pneg %p130
      $region22: #{tpu_custom_call.1} parent=5 // pred_check_branch
        %133 = sbr.rel (%p131) target = $region24
      $region23: #{tpu_custom_call.1} parent=5 // pred_region
        // Predicated region
        $region25: #{tpu_custom_call.1} parent=23 // pred_check
          %p134 = pneg %p35
        $region26: #{tpu_custom_call.1} parent=23 // pred_check_branch
          %136 = sbr.rel (%p134) target = $region28
        $region27: #{tpu_custom_call.1} parent=23 // pred_region
          %s137 = sand.u32 %s25, 1
          %s138 = scalar_lea.sflag [#allocation3], %s137
          %s139 = sand.u32 %s25, 1
          %s140 = smul.addr %s139, 104
          %s141 = scalar_lea.vmem [#allocation2], %s140
          %s142 = smul.u32 13, %s15
          %s143 = ssub.s32 25, %s142
          %p144 = scmp.lt.s32.totalorder %s143, 13
          %s145 = scalar_select %p144, %s143, 13
          %s146 = smul.u32 128, %s145
          %s148 = ssub.s32 1664, %s146
          %149 = vsyncadd %s138, %s148
          %p150 = scmp.ne.s32.totalorder 0, %s146
          %s151 = smul.addr %s142, 128
          %s152 = scalar_lea.hbm %s0, %s151
          %s153 = smul.u32 8, %s145
          %s154 = sshll.u32 %s141, 4
          %s155 = int_to_ptr.vmem [resolvable:$true] %s154
          %s156 = sshll.u32 %s153, 4
          %160 = dma.hbm_to_vmem [thread:$0]  (%p150), %s152, %s156, %s155, %s138, 128, 128, 8
        $region28: #{tpu_custom_call.1} parent=23 // pred_fallthru
          _
      $region24: #{tpu_custom_call.1} parent=5 // pred_fallthru
        _
      %p161 = scmp.le.s32.totalorder 1, %s15
      %p162 = scmp.lt.s32.totalorder %s15, 3
      %p163 = pnand %p161, %p162
      %p164 = pneg %p163
      // Predicated region
      $region29: #{tpu_custom_call.1} parent=5 // pred_check
        _
      $region30: #{tpu_custom_call.1} parent=5 // pred_check_branch
        %166 = sbr.rel (%p163) target = $region32
      $region31: #{tpu_custom_call.1} parent=5 // pred_region
        %s167 = ssub.s32 %s15, 1
        %s168 = sand.u32 %s28, 1
        %s169 = scalar_lea.sflag [#allocation3], %s168
        %s170 = sand.u32 %s28, 1
        %s171 = smul.addr %s170, 104
        %s172 = scalar_lea.vmem [#allocation2], %s171
        // Predicated region
        $region33: #{tpu_custom_call.1} parent=31 // pred_check
          %p173 = pneg %p41
        $region34: #{tpu_custom_call.1} parent=31 // pred_check_branch
          %175 = sbr.rel (%p173) target = $region36
        $region35: #{tpu_custom_call.1} parent=31 // pred_region
          %176 = dma.done %s169, 1664
        $region36: #{tpu_custom_call.1} parent=31 // pred_fallthru
          _
        %s177 = sand.u32 %s28, 1
        %s178 = scalar_lea.sflag [#allocation3], %s177
        %s179 = sand.u32 %s28, 1
        %s180 = smul.addr %s179, 104
        %s181 = scalar_lea.vmem [#allocation2], %s180
        %p182 = pneg %p41
        %p183 = pneg %p38
        %p184 = pneg %p62
        %p185 = pneg %p59
        %p186 = pneg %p83
        %p187 = pneg %p80
        %p188 = pneg %p109
        %p189 = pneg %p106
        %s190 = sand.u32 %s96, 1
        %s191 = scalar_lea.sflag [#allocation4], %s190
        %s192 = sand.u32 %s96, 1
        %s193 = smul.addr %s192, 104
        %s194 = scalar_lea.vmem [#allocation5], %s193
        %s195 = smul.u32 13, %s20
        %s196 = ssub.s32 25, %s195
        %p197 = scmp.lt.s32.totalorder %s196, 13
        %s198 = scalar_select %p197, %s196, 13
        %s199 = smul.u32 128, %s198
        %s200 = smul.u32 13, %s20
        %s201 = ssub.s32 25, %s200
        %p202 = scmp.lt.s32.totalorder %s201, 13
        %s203 = scalar_select %p202, %s201, 13
        %s204 = smul.u32 128, %s203
        %v205 = vld [vmem:[%s172] sm:$0xff]
        %v206 = vld [vmem:[%s172 + $0x8] sm:$0xff]
        %v207 = vld [vmem:[%s172 + $0x10] sm:$0xff]
        %v208 = vld [vmem:[%s172 + $0x18] sm:$0xff]
        %v209 = vld [vmem:[%s172 + $0x20] sm:$0xff]
        %v210 = vld [vmem:[%s172 + $0x28] sm:$0xff]
        %v211 = vld [vmem:[%s172 + $0x30] sm:$0xff]
        %v212 = vld [vmem:[%s172 + $0x38] sm:$0xff]
        %v213 = vld [vmem:[%s172 + $0x40] sm:$0xff]
        %v214 = vld [vmem:[%s172 + $0x48] sm:$0xff]
        %v215 = vld [vmem:[%s172 + $0x50] sm:$0xff]
        %v216 = vld [vmem:[%s172 + $0x58] sm:$0xff]
        %v217 = vld [vmem:[%s172 + $0x60] sm:$0xff]
        %s218 = smul.u32 %s20, 104
        %v219 = vlaneseq
        %v220 = vshrl.u32 %v219, 7
        %v221 = vadd.s32 %v220, 8
        %v222 = vadd.s32 %v220, 16
        %v223 = vadd.s32 %v220, 24
        %v224 = vadd.s32 %v220, 32
        %v225 = vadd.s32 %v220, 40
        %v226 = vadd.s32 %v220, 48
        %v227 = vadd.s32 %v220, 56
        %v228 = vadd.s32 %v220, 64
        %v229 = vadd.s32 %v220, 72
        %v230 = vadd.s32 %v220, 80
        %v231 = vadd.s32 %v220, 88
        %v232 = vadd.s32 %v220, 96
        %v233 = vstv %s218
        %v234 = vadd.s32 %v233, %v220
        %v235 = vadd.s32 %v233, %v221
        %v236 = vadd.s32 %v233, %v222
        %v237 = vadd.s32 %v233, %v223
        %v238 = vadd.s32 %v233, %v224
        %v239 = vadd.s32 %v233, %v225
        %v240 = vadd.s32 %v233, %v226
        %v241 = vadd.s32 %v233, %v227
        %v242 = vadd.s32 %v233, %v228
        %v243 = vadd.s32 %v233, %v229
        %v244 = vadd.s32 %v233, %v230
        %v245 = vadd.s32 %v233, %v231
        %v246 = vadd.s32 %v233, %v232
        %vm247 = vcmp.lt.s32.totalorder %v234, 200
        %vm248 = vcmp.lt.s32.totalorder %v235, 200
        %vm249 = vcmp.lt.s32.totalorder %v236, 200
        %vm250 = vcmp.lt.s32.totalorder %v237, 200
        %vm251 = vcmp.lt.s32.totalorder %v238, 200
        %vm252 = vcmp.lt.s32.totalorder %v239, 200
        %vm253 = vcmp.lt.s32.totalorder %v240, 200
        %vm254 = vcmp.lt.s32.totalorder %v241, 200
        %vm255 = vcmp.lt.s32.totalorder %v242, 200
        %vm256 = vcmp.lt.s32.totalorder %v243, 200
        %vm257 = vcmp.lt.s32.totalorder %v244, 200
        %vm258 = vcmp.lt.s32.totalorder %v245, 200
        %vm259 = vcmp.lt.s32.totalorder %v246, 200
        %v260 = vsel %vm247, %v205, 0.0
        %v261 = vsel %vm248, %v206, 0.0
        %v262 = vsel %vm249, %v207, 0.0
        %v263 = vsel %vm250, %v208, 0.0
        %v264 = vsel %vm251, %v209, 0.0
        %v265 = vsel %vm252, %v210, 0.0
        %v266 = vsel %vm253, %v211, 0.0
        %v267 = vsel %vm254, %v212, 0.0
        %v268 = vsel %vm255, %v213, 0.0
        %v269 = vsel %vm256, %v214, 0.0
        %v270 = vsel %vm257, %v215, 0.0
        %v271 = vsel %vm258, %v216, 0.0
        %v272 = vsel %vm259, %v217, 0.0
        %273 = vadd.xlane.f32.xlu0 %v260
        %v274 = vpop.xlane.xlu0 %273
        %275 = vadd.xlane.f32.xlu0 %v261
        %v276 = vpop.xlane.xlu0 %275
        %277 = vadd.xlane.f32.xlu0 %v262
        %v278 = vpop.xlane.xlu0 %277
        %279 = vadd.xlane.f32.xlu0 %v263
        %v280 = vpop.xlane.xlu0 %279
        %281 = vadd.xlane.f32.xlu0 %v264
        %v282 = vpop.xlane.xlu0 %281
        %283 = vadd.xlane.f32.xlu0 %v265
        %v284 = vpop.xlane.xlu0 %283
        %285 = vadd.xlane.f32.xlu0 %v266
        %v286 = vpop.xlane.xlu0 %285
        %287 = vadd.xlane.f32.xlu0 %v267
        %v288 = vpop.xlane.xlu0 %287
        %289 = vadd.xlane.f32.xlu0 %v268
        %v290 = vpop.xlane.xlu0 %289
        %291 = vadd.xlane.f32.xlu0 %v269
        %v292 = vpop.xlane.xlu0 %291
        %293 = vadd.xlane.f32.xlu0 %v270
        %v294 = vpop.xlane.xlu0 %293
        %295 = vadd.xlane.f32.xlu0 %v271
        %v296 = vpop.xlane.xlu0 %295
        %297 = vadd.xlane.f32.xlu0 %v272
        %v298 = vpop.xlane.xlu0 %297
        %v299 = vrcp.pop 128.0
        %v300 = vmul.f32 %v274, %v299
        %v301 = vmul.f32 %v276, %v299
        %v302 = vmul.f32 %v278, %v299
        %v303 = vmul.f32 %v280, %v299
        %v304 = vmul.f32 %v282, %v299
        %v305 = vmul.f32 %v284, %v299
        %v306 = vmul.f32 %v286, %v299
        %v307 = vmul.f32 %v288, %v299
        %v308 = vmul.f32 %v290, %v299
        %v309 = vmul.f32 %v292, %v299
        %v310 = vmul.f32 %v294, %v299
        %v311 = vmul.f32 %v296, %v299
        %v312 = vmul.f32 %v298, %v299
        %v313 = vsub.f32 %v260, %v300
        %v314 = vsub.f32 %v261, %v301
        %v315 = vsub.f32 %v262, %v302
        %v316 = vsub.f32 %v263, %v303
        %v317 = vsub.f32 %v264, %v304
        %v318 = vsub.f32 %v265, %v305
        %v319 = vsub.f32 %v266, %v306
        %v320 = vsub.f32 %v267, %v307
        %v321 = vsub.f32 %v268, %v308
        %v322 = vsub.f32 %v269, %v309
        %v323 = vsub.f32 %v270, %v310
        %v324 = vsub.f32 %v271, %v311
        %v325 = vsub.f32 %v272, %v312
        %v326 = vmul.f32 %v313, %v313
        %v327 = vmul.f32 %v314, %v314
        %v328 = vmul.f32 %v315, %v315
        %v329 = vmul.f32 %v316, %v316
        %v330 = vmul.f32 %v317, %v317
        %v331 = vmul.f32 %v318, %v318
        %v332 = vmul.f32 %v319, %v319
        %v333 = vmul.f32 %v320, %v320
        %v334 = vmul.f32 %v321, %v321
        %v335 = vmul.f32 %v322, %v322
        %v336 = vmul.f32 %v323, %v323
        %v337 = vmul.f32 %v324, %v324
        %v338 = vmul.f32 %v325, %v325
        %339 = vadd.xlane.f32.xlu0 %v326
        %v340 = vpop.xlane.xlu0 %339
        %341 = vadd.xlane.f32.xlu0 %v327
        %v342 = vpop.xlane.xlu0 %341
        %343 = vadd.xlane.f32.xlu0 %v328
        %v344 = vpop.xlane.xlu0 %343
        %345 = vadd.xlane.f32.xlu0 %v329
        %v346 = vpop.xlane.xlu0 %345
        %347 = vadd.xlane.f32.xlu0 %v330
        %v348 = vpop.xlane.xlu0 %347
        %349 = vadd.xlane.f32.xlu0 %v331
        %v350 = vpop.xlane.xlu0 %349
        %351 = vadd.xlane.f32.xlu0 %v332
        %v352 = vpop.xlane.xlu0 %351
        %353 = vadd.xlane.f32.xlu0 %v333
        %v354 = vpop.xlane.xlu0 %353
        %355 = vadd.xlane.f32.xlu0 %v334
        %v356 = vpop.xlane.xlu0 %355
        %357 = vadd.xlane.f32.xlu0 %v335
        %v358 = vpop.xlane.xlu0 %357
        %359 = vadd.xlane.f32.xlu0 %v336
        %v360 = vpop.xlane.xlu0 %359
        %361 = vadd.xlane.f32.xlu0 %v337
        %v362 = vpop.xlane.xlu0 %361
        %363 = vadd.xlane.f32.xlu0 %v338
        %v364 = vpop.xlane.xlu0 %363
        %v365 = vmul.f32 %v340, %v299
        %v366 = vmul.f32 %v342, %v299
        %v367 = vmul.f32 %v344, %v299
        %v368 = vmul.f32 %v346, %v299
        %v369 = vmul.f32 %v348, %v299
        %v370 = vmul.f32 %v350, %v299
        %v371 = vmul.f32 %v352, %v299
        %v372 = vmul.f32 %v354, %v299
        %v373 = vmul.f32 %v356, %v299
        %v374 = vmul.f32 %v358, %v299
        %v375 = vmul.f32 %v360, %v299
        %v376 = vmul.f32 %v362, %v299
        %v377 = vmul.f32 %v364, %v299
        %v378 = vadd.f32 %v365, 1e-05
        %v379 = vadd.f32 %v366, 1e-05
        %v380 = vadd.f32 %v367, 1e-05
        %v381 = vadd.f32 %v368, 1e-05
        %v382 = vadd.f32 %v369, 1e-05
        %v383 = vadd.f32 %v370, 1e-05
        %v384 = vadd.f32 %v371, 1e-05
        %v385 = vadd.f32 %v372, 1e-05
        %v386 = vadd.f32 %v373, 1e-05
        %v387 = vadd.f32 %v374, 1e-05
        %v388 = vadd.f32 %v375, 1e-05
        %v389 = vadd.f32 %v376, 1e-05
        %v390 = vadd.f32 %v377, 1e-05
        %v391 = vrsqrt.pop %v378
        %v392 = vrsqrt.pop %v379
        %v393 = vrsqrt.pop %v380
        %v394 = vrsqrt.pop %v381
        %v395 = vrsqrt.pop %v382
        %v396 = vrsqrt.pop %v383
        %v397 = vrsqrt.pop %v384
        %v398 = vrsqrt.pop %v385
        %v399 = vrsqrt.pop %v386
        %v400 = vrsqrt.pop %v387
        %v401 = vrsqrt.pop %v388
        %v402 = vrsqrt.pop %v389
        %v403 = vrsqrt.pop %v390
        %v404 = vmul.f32 %v313, %v391
        %v405 = vmul.f32 %v314, %v392
        %v406 = vmul.f32 %v315, %v393
        %v407 = vmul.f32 %v316, %v394
        %v408 = vmul.f32 %v317, %v395
        %v409 = vmul.f32 %v318, %v396
        %v410 = vmul.f32 %v319, %v397
        %v411 = vmul.f32 %v320, %v398
        %v412 = vmul.f32 %v321, %v399
        %v413 = vmul.f32 %v322, %v400
        %v414 = vmul.f32 %v323, %v401
        %v415 = vmul.f32 %v324, %v402
        %v416 = vmul.f32 %v325, %v403
        %v417 = vld [vmem:[%s1] sm:$0x1]
        %v419 = vlaneseq
        %v420 = vshrl.u32 %v419, 7
        %v421 = vsub.s32 0, %v420
        %v422 = vrot.slane %v417, %v421
        %v424 = vmul.f32 %v404, %v422
        %v425 = vmul.f32 %v405, %v422
        %v426 = vmul.f32 %v406, %v422
        %v427 = vmul.f32 %v407, %v422
        %v428 = vmul.f32 %v408, %v422
        %v429 = vmul.f32 %v409, %v422
        %v430 = vmul.f32 %v410, %v422
        %v431 = vmul.f32 %v411, %v422
        %v432 = vmul.f32 %v412, %v422
        %v433 = vmul.f32 %v413, %v422
        %v434 = vmul.f32 %v414, %v422
        %v435 = vmul.f32 %v415, %v422
        %v436 = vmul.f32 %v416, %v422
        %v437 = vld [vmem:[%s2] sm:$0x1]
        %v439 = vlaneseq
        %v440 = vshrl.u32 %v439, 7
        %v441 = vsub.s32 0, %v440
        %v442 = vrot.slane %v437, %v441
        %v444 = vadd.f32 %v424, %v442
        %v445 = vadd.f32 %v425, %v442
        %v446 = vadd.f32 %v426, %v442
        %v447 = vadd.f32 %v427, %v442
        %v448 = vadd.f32 %v428, %v442
        %v449 = vadd.f32 %v429, %v442
        %v450 = vadd.f32 %v430, %v442
        %v451 = vadd.f32 %v431, %v442
        %v452 = vadd.f32 %v432, %v442
        %v453 = vadd.f32 %v433, %v442
        %v454 = vadd.f32 %v434, %v442
        %v455 = vadd.f32 %v435, %v442
        %v456 = vadd.f32 %v436, %v442
        %457 = vst [vmem:[%s194] sm:$0xff] %v444
        %458 = vst [vmem:[%s194 + $0x8] sm:$0xff] %v445
        %459 = vst [vmem:[%s194 + $0x10] sm:$0xff] %v446
        %460 = vst [vmem:[%s194 + $0x18] sm:$0xff] %v447
        %461 = vst [vmem:[%s194 + $0x20] sm:$0xff] %v448
        %462 = vst [vmem:[%s194 + $0x28] sm:$0xff] %v449
        %463 = vst [vmem:[%s194 + $0x30] sm:$0xff] %v450
        %464 = vst [vmem:[%s194 + $0x38] sm:$0xff] %v451
        %465 = vst [vmem:[%s194 + $0x40] sm:$0xff] %v452
        %466 = vst [vmem:[%s194 + $0x48] sm:$0xff] %v453
        %467 = vst [vmem:[%s194 + $0x50] sm:$0xff] %v454
        %468 = vst [vmem:[%s194 + $0x58] sm:$0xff] %v455
        %469 = vst [vmem:[%s194 + $0x60] sm:$0xff] %v456
        %s470 = sand.u32 %s96, 1
        %s471 = scalar_lea.sflag [#allocation4], %s470
        %s472 = sand.u32 %s96, 1
        %s473 = smul.addr %s472, 104
        %s474 = scalar_lea.vmem [#allocation5], %s473
        // Predicated region
        $region37: #{tpu_custom_call.1} parent=31 // pred_check
          %p475 = pneg %p106
        $region38: #{tpu_custom_call.1} parent=31 // pred_check_branch
          %477 = sbr.rel (%p475) target = $region40
        $region39: #{tpu_custom_call.1} parent=31 // pred_region
          %s478 = smul.u32 13, %s20
          %s479 = ssub.s32 25, %s478
          %p480 = scmp.lt.s32.totalorder %s479, 13
          %s481 = scalar_select %p480, %s479, 13
          %s482 = smul.u32 128, %s481
          %s484 = ssub.s32 1664, %s482
          %485 = vsyncadd %s471, %s484
          %p486 = scmp.ne.s32.totalorder 0, %s482
          %s487 = smul.addr %s478, 128
          %s488 = scalar_lea.hbm %s3, %s487
          %s489 = smul.u32 8, %s481
          %s490 = sshll.u32 %s474, 4
          %s491 = int_to_ptr.vmem [resolvable:$true] %s490
          %s492 = sshll.u32 %s489, 4
          %496 = dma.vmem_to_hbm [thread:$0]  (%p486), %s491, %s492, %s488, %s471, 128, 128, 8
        $region40: #{tpu_custom_call.1} parent=31 // pred_fallthru
          _
      $region32: #{tpu_custom_call.1} parent=5 // pred_fallthru
        _
      %p497 = scmp.le.s32.totalorder 2, %s15
      // Predicated region
      $region41: #{tpu_custom_call.1} parent=5 // pred_check
        %p498 = pneg %p497
      $region42: #{tpu_custom_call.1} parent=5 // pred_check_branch
        %500 = sbr.rel (%p498) target = $region44
      $region43: #{tpu_custom_call.1} parent=5 // pred_region
        %s501 = ssub.s32 %s15, 2
        // Predicated region
        $region45: #{tpu_custom_call.1} parent=43 // pred_check
          %p502 = pneg %p112
        $region46: #{tpu_custom_call.1} parent=43 // pred_check_branch
          %504 = sbr.rel (%p502) target = $region48
        $region47: #{tpu_custom_call.1} parent=43 // pred_region
          %s505 = sand.u32 %s97, 1
          %s506 = scalar_lea.sflag [#allocation4], %s505
          %s507 = sand.u32 %s97, 1
          %s508 = smul.addr %s507, 104
          %s509 = scalar_lea.vmem [#allocation5], %s508
          %510 = dma.done %s506, 1664
        $region48: #{tpu_custom_call.1} parent=43 // pred_fallthru
          _
      $region44: #{tpu_custom_call.1} parent=5 // pred_fallthru
        _
    $region6: #{tpu_custom_call.1} parent=1 // loop_footer
      %s19 = sadd.s32 1, %s15
    $region7: #{tpu_custom_call.1} parent=1 // loop_footer_branch
      %14 = sbr.rel target = $region3
    $region8: #{tpu_custom_call.1} parent=1 // loop_exit
      _
    %511 = vsyncpa [#allocation3], 1
    %s512 = scalar_lea.sflag [#allocation3], 1
    %513 = vsyncpa %s512, 1
    %514 = vsyncpa [#allocation4], 1
    %s515 = scalar_lea.sflag [#allocation4], 1
    %516 = vsyncpa %s515, 1

</llo_original>
